<compile_context>
chip_gen: v5e
topology: v5e:2x2
jax: 0.10.0
libtpu: 0.0.40
codegen_flags: <defaults>
</compile_context>

<pallas_src>
import functools

import jax
import jax.numpy as jnp
from jax import lax
from jax.experimental import pallas as pl
from jax.experimental.pallas import tpu as pltpu

_LANES = 128
# Double-buffered (x2) on both operands (x2): budget for the input pipeline.
_INPUT_VMEM_BUDGET = 16 * 1024 * 1024
_VMEM_LIMIT_BYTES = 32 * 1024 * 1024      # safe on v5e/v6e/v7x
_MAX_CHUNK_ROWS = 1024                     # 1024 x 128 x 4B = 512 KiB f32 working chunk


def _round_up(x, m):
    return (x + m - 1) // m * m


def _mse_partial_kernel(x_ref, t_ref, o_ref, *, total_rows, block_rows,
                        chunk_rows, steps_per_core, needs_mask):
    c = pl.program_id(0)   # core / row-range split (parallel)
    i = pl.program_id(1)   # reduction step within the split (arbitrary)

    @pl.when(i == 0)
    def _():
        o_ref[...] = jnp.zeros_like(o_ref)

    block_start = (c * steps_per_core + i) * block_rows
    num_chunks = block_rows // chunk_rows

    def chunk_sum(k, masked):
        r0 = k * chunk_rows  # static
        xv = x_ref[pl.ds(r0, chunk_rows), :].astype(jnp.float32)
        tv = t_ref[pl.ds(r0, chunk_rows), :].astype(jnp.float32)
        d = xv - tv
        sq = d * d
        if masked:
            row_idx = lax.broadcasted_iota(jnp.int32, sq.shape, 0) + (block_start + r0)
            sq = jnp.where(row_idx < total_rows, sq, 0.0)
        # VPU-only partial reduction onto a vreg-shaped (8,128) accumulator.
        return sq.reshape(chunk_rows // 8, 8, _LANES).sum(axis=0)

    def run(masked):
        acc = jnp.zeros((8, _LANES), jnp.float32)
        for k in range(num_chunks):   # static, fully unrolled
            acc = acc + chunk_sum(k, masked)
        return acc

    if needs_mask:
        is_interior = block_start + block_rows <= total_rows

        @pl.when(is_interior)
        def _():
            o_ref[...] += run(masked=False)

        @pl.when(jnp.logical_not(is_interior))
        def _():
            o_ref[...] += run(masked=True)
    else:
        o_ref[...] += run(masked=False)


def _as_lane_slab(x):
    flat = x.reshape(-1)
    n = flat.shape[0]
    rows = pl.cdiv(n, _LANES)
    lane_pad = rows * _LANES - n
    if lane_pad:
        # Identical zero padding on both operands -> contributes 0 to the sum.
        flat = jnp.pad(flat, (0, lane_pad))
    return flat.reshape(rows, _LANES), n, rows


def _choose_tiling(rows, itemsize, max_block_rows=None):
    # Sublane tile: 8 for 32-bit, 16 for bf16, 32 for int8/fp8.
    sublane = max(8, 32 // max(1, itemsize))
    # Largest row tile whose double-buffered pair of input operands fits budget.
    budget_rows = _INPUT_VMEM_BUDGET // (4 * _LANES * itemsize)
    budget_rows = max(sublane, (budget_rows // sublane) * sublane)
    block_rows = min(budget_rows, _round_up(rows, sublane))
    if max_block_rows is not None:
        block_rows = min(block_rows, max(sublane, _round_up(max_block_rows, sublane)))
    if block_rows > _MAX_CHUNK_ROWS:
        block_rows = (block_rows // _MAX_CHUNK_ROWS) * _MAX_CHUNK_ROWS
        chunk_rows = _MAX_CHUNK_ROWS
    else:
        chunk_rows = block_rows
    return block_rows, chunk_rows


def content_loss_forward(x, target, *, max_block_rows=None):
    """Mirrors ContentLoss.forward: computes mse_loss(x, target), returns x.

    Returns (x, loss) where loss is a float32 scalar.
    """
    assert x.shape == target.shape, "input/target shape mismatch"
    target = target.astype(x.dtype)

    x2d, n_elems, rows = _as_lane_slab(x)
    t2d, _, _ = _as_lane_slab(target)

    itemsize = x.dtype.itemsize
    block_rows, chunk_rows = _choose_tiling(rows, itemsize, max_block_rows)

    total_blocks = pl.cdiv(rows, block_rows)
    num_splits = 2 if total_blocks >= 2 else 1          # v7x megacore split
    steps_per_core = pl.cdiv(total_blocks, num_splits)
    needs_mask = (num_splits * steps_per_core * block_rows) != rows

    def in_index_map(c, i):
        blk = c * steps_per_core + i
        # Clamp the (at most one) extra block of the second split; the kernel
        # mask zeroes its contribution entirely.
        return (jnp.minimum(blk, total_blocks - 1), 0)

    kernel = functools.partial(
        _mse_partial_kernel,
        total_rows=rows,
        block_rows=block_rows,
        chunk_rows=chunk_rows,
        steps_per_core=steps_per_core,
        needs_mask=needs_mask,
    )

    partial = pl.pallas_call(
        kernel,
        out_shape=jax.ShapeDtypeStruct((num_splits, 8, _LANES), jnp.float32),
        grid_spec=pltpu.PrefetchScalarGridSpec(
            num_scalar_prefetch=0,
            grid=(num_splits, steps_per_core),
            in_specs=[
                pl.BlockSpec((block_rows, _LANES), in_index_map),
                pl.BlockSpec((block_rows, _LANES), in_index_map),
            ],
            out_specs=pl.BlockSpec((None, 8, _LANES), lambda c, i: (c, 0, 0)),
        ),
        compiler_params=pltpu.CompilerParams(
            dimension_semantics=("parallel", "arbitrary"),
            vmem_limit_bytes=_VMEM_LIMIT_BYTES,
        ),
    )(x2d, t2d)

    # Cross-lane/sublane collapse + 1/N once, in the wrapper epilogue.
    loss = jnp.sum(partial) / jnp.float32(n_elems)
    # TODO(synk): PyTorch stores self.loss as a module attribute (side effect);
    # here the loss is returned alongside the unchanged input instead.
    return x, loss


def _check(shape, key, max_block_rows=None):
    k_in, k_tgt = jax.random.split(key)
    x = jax.random.normal(k_in, shape, dtype=jnp.float32)
    target = jax.random.normal(k_tgt, shape, dtype=jnp.float32)  # "detached" target
    out, loss = content_loss_forward(x, target, max_block_rows=max_block_rows)
    out = jax.block_until_ready(out)
    loss = jax.block_until_ready(loss)
    ref = jnp.mean((x - target) ** 2)
    assert jnp.allclose(loss, ref, rtol=1e-5, atol=1e-6), (shape, max_block_rows, loss, ref)
    assert jnp.array_equal(out, x)  # forward returns input unchanged


if __name__ == "__main__":
    key = jax.random.PRNGKey(0)
    keys = jax.random.split(key, 5)

    # Main case: small NCHW feature map, default tiling (single block).
    _check((2, 4, 16, 16), keys[0])
    # Multi-block + 2-way core split, exact coverage (no mask path).
    _check((2, 4, 16, 16), keys[1], max_block_rows=8)
    # Partial edge block (rows % block_rows != 0) with row mask.
    _check((1, 1, 13, 128), keys[2], max_block_rows=8)
    # Odd block count over 2 splits: clamped, fully-masked duplicate block.
    _check((1, 4, 5, 128), keys[3], max_block_rows=8)
    # Non-lane-aligned element count (zero lane padding) + edge-row mask.
    _check((3, 5, 7, 11), keys[4])

    print("KERNEL_OK")
</pallas_src>

<mosaic_0001>
module attributes {stable_mosaic.version = 11 : i64} {
  func.func @_mse_partial_kernel(%arg0: i32, %arg1: i32, %arg2: memref<16x128xf32, #tpu.memory_space<vmem>>, %arg3: memref<16x128xf32, #tpu.memory_space<vmem>>, %arg4: memref<1x8x128xf32, #tpu.memory_space<vmem>>) attributes {dimension_semantics = [#tpu.dimension_semantics<parallel>, #tpu.dimension_semantics<arbitrary>], iteration_bounds = array<i64: 1, 1>, scalar_prefetch = 0 : i64, scratch_operands = 0 : i64, tpu.core_type = #tpu.core_type<tc>, window_params = [{transform_indices = @transform_0, window_bounds = array<i64: 16, 128>}, {transform_indices = @transform_1, window_bounds = array<i64: 16, 128>}, {transform_indices = @transform_2, window_bounds = array<i64: 1, 8, 128>}]} {
    %c0_i32 = arith.constant 0 : i32
    %0 = arith.cmpi eq, %arg1, %c0_i32 : i32
    %1 = arith.extui %0 : i1 to i32
    %c0_i32_0 = arith.constant 0 : i32
    %2 = arith.cmpi ne, %1, %c0_i32_0 : i32
    scf.if %2 {
      %cst_11 = arith.constant 0.000000e+00 : f32
      %17 = vector.broadcast %cst_11 : f32 to vector<8x128xf32>
      %c0_12 = arith.constant 0 : index
      %c0_13 = arith.constant 0 : index
      %c0_14 = arith.constant 0 : index
      %18 = vector.load %arg4[%c0_12, %c0_13, %c0_14] : memref<1x8x128xf32, #tpu.memory_space<vmem>>, vector<1x8x128xf32>
      %19 = vector.shape_cast %18 : vector<1x8x128xf32> to vector<8x128xf32>
      %20 = vector.shape_cast %17 : vector<8x128xf32> to vector<1x8x128xf32>
      tpu.vector_store %arg4[%c0_12, %c0_13, %c0_14], %20 {strides = array<i32>} : memref<1x8x128xf32, #tpu.memory_space<vmem>>, vector<1x8x128xf32>,
    } else {
    }
    %c0 = arith.constant 0 : index
    %c0_1 = arith.constant 0 : index
    %c0_2 = arith.constant 0 : index
    %3 = vector.load %arg4[%c0, %c0_1, %c0_2] : memref<1x8x128xf32, #tpu.memory_space<vmem>>, vector<1x8x128xf32>
    %4 = vector.shape_cast %3 : vector<1x8x128xf32> to vector<8x128xf32>
    %cst = arith.constant 0.000000e+00 : f32
    %5 = vector.broadcast %cst : f32 to vector<8x128xf32>
    %c0_3 = arith.constant 0 : index
    %c0_4 = arith.constant 0 : index
    %6 = vector.load %arg2[%c0_3, %c0_4] : memref<16x128xf32, #tpu.memory_space<vmem>>, vector<16x128xf32>
    %c0_5 = arith.constant 0 : index
    %c0_6 = arith.constant 0 : index
    %7 = vector.load %arg3[%c0_5, %c0_6] : memref<16x128xf32, #tpu.memory_space<vmem>>, vector<16x128xf32>
    %8 = arith.subf %6, %7 : vector<16x128xf32>
    %9 = arith.mulf %8, %8 : vector<16x128xf32>
    %10 = vector.shape_cast %9 : vector<16x128xf32> to vector<2x8x128xf32>
    %cst_7 = arith.constant dense<0.000000e+00> : vector<8x128xf32>
    %11 = vector.multi_reduction <add>, %10, %cst_7 [0] : vector<2x8x128xf32> to vector<8x128xf32>
    %12 = arith.addf %5, %11 : vector<8x128xf32>
    %13 = arith.addf %4, %12 : vector<8x128xf32>
    %c0_8 = arith.constant 0 : index
    %c0_9 = arith.constant 0 : index
    %c0_10 = arith.constant 0 : index
    %14 = vector.load %arg4[%c0_8, %c0_9, %c0_10] : memref<1x8x128xf32, #tpu.memory_space<vmem>>, vector<1x8x128xf32>
    %15 = vector.shape_cast %14 : vector<1x8x128xf32> to vector<8x128xf32>
    %16 = vector.shape_cast %13 : vector<8x128xf32> to vector<1x8x128xf32>
    tpu.vector_store %arg4[%c0_8, %c0_9, %c0_10], %16 {strides = array<i32>} : memref<1x8x128xf32, #tpu.memory_space<vmem>>, vector<1x8x128xf32>,
    return
  }
  func.func @transform_0(%arg0: i32, %arg1: i32) -> (i32, i32) {
    %c1_i32 = arith.constant 1 : i32
    %0 = arith.muli %arg0, %c1_i32 : i32
    %1 = arith.addi %0, %arg1 : i32
    %c0_i32 = arith.constant 0 : i32
    %2 = arith.minsi %1, %c0_i32 : i32
    %c0_i32_0 = arith.constant 0 : i32
    %c0_i32_1 = arith.constant 0 : i32
    return %2, %c0_i32_0 : i32, i32
  }
  func.func @transform_1(%arg0: i32, %arg1: i32) -> (i32, i32) {
    %c1_i32 = arith.constant 1 : i32
    %0 = arith.muli %arg0, %c1_i32 : i32
    %1 = arith.addi %0, %arg1 : i32
    %c0_i32 = arith.constant 0 : i32
    %2 = arith.minsi %1, %c0_i32 : i32
    %c0_i32_0 = arith.constant 0 : i32
    %c0_i32_1 = arith.constant 0 : i32
    return %2, %c0_i32_0 : i32, i32
  }
  func.func @transform_2(%arg0: i32, %arg1: i32) -> (i32, i32, i32) {
    %c0_i32 = arith.constant 0 : i32
    %c0_i32_0 = arith.constant 0 : i32
    %c0_i32_1 = arith.constant 0 : i32
    return %arg0, %c0_i32, %c0_i32_0 : i32, i32, i32
  }
}

</mosaic_0001>

<llo_original>
// kernel: tpu_custom_call.1
$region0: #{tpu_custom_call.1}
  #allocation0 [shape = 'u32[]', space=smem, size = 0x4, offset = 0x4, fixed_abs, tag = 'smem constant byte address 0x4 - core index']
  #allocation1 [shape = 'u32[72,128]{1,0:T(1,128)}', space=vmem, size = 0x9000, scoped, tag = 'internal scratch']
  %s0 = inlined_call_operand.hbm [shape: f32[16,128], index: 0, kind: input, shape index: {}]
  %s1 = inlined_call_operand.hbm [shape: f32[16,128], index: 1, kind: input, shape index: {}]
  %s2 = inlined_call_operand.hbm [shape: f32[1,8,128], index: 2, kind: output, shape index: {}]
  %s3 = sld [smem:[#allocation0]]
  $region30: #{tpu_custom_call.1} parent=0
    _
  %s5 = ssub.s32 1, %s3
  %s6 = scalar_select 0, %s5, %s3
  $region1: #{tpu_custom_call.1} parent=0
    #allocation2 [shape = 'u8[8192]{0}', space=vmem, size = 0x2000, scoped, tag = 'input window, operand 0, single buffered']
    #allocation3 [shape = 's32[1]{0}', space=sflag, size = 0x4, scoped, tag = 'scoped memory for tpu_custom_call.1']
    #allocation4 [shape = 's32[1]{0}', space=sflag, size = 0x4, scoped, tag = 'scoped memory for tpu_custom_call.1']
    #allocation5 [shape = 'u8[8192]{0}', space=vmem, size = 0x2000, scoped, tag = 'input window, operand 1, single buffered']
    #allocation6 [shape = 's32[1]{0}', space=sflag, size = 0x4, scoped, tag = 'scoped memory for tpu_custom_call.1']
    #allocation7 [shape = 'u8[4096]{0}', space=vmem, size = 0x1000, scoped, tag = 'output window, operand 0, single buffered']
    %7 = vsyncpa [#allocation3], 0
    %8 = vsyncpa [#allocation6], 0
    %9 = vsyncpa [#allocation4], 0
    // Predicated region
    $region2: #{tpu_custom_call.1} parent=1 // pred_check
      _
    $region3: #{tpu_custom_call.1} parent=1 // pred_check_branch
      %11 = sbr.rel (0) target = $region5
    $region4: #{tpu_custom_call.1} parent=1 // pred_region
      %s12 = sadd.s32 0, 0
      %p13 = scmp.lt.s32.totalorder %s12, 0
      %s14 = scalar_select %p13, %s12, 0
      %s15 = smul.u32 2, %s14
      %17 = vsyncadd [#allocation3], 0
      %s18 = smul.addr %s15, 8
      %s19 = scalar_lea.hbm %s0, %s18
      %s20 = sshll.u32 %s19, 4
      %s21 = int_to_ptr.hbm [resolvable:$true] %s20
      %s22 = sshll.u32 [#allocation2], 4
      %s23 = int_to_ptr.vmem [resolvable:$true] %s22
      %28 = dma.hbm_to_vmem [thread:$0]  %s21, 256, %s23, [#allocation3], 128, 128, 8
    $region5: #{tpu_custom_call.1} parent=1 // pred_fallthru
      _
    // Predicated region
    $region6: #{tpu_custom_call.1} parent=1 // pred_check
      _
    $region7: #{tpu_custom_call.1} parent=1 // pred_check_branch
      %30 = sbr.rel (0) target = $region9
    $region8: #{tpu_custom_call.1} parent=1 // pred_region
      %s31 = sadd.s32 0, 0
      %p32 = scmp.lt.s32.totalorder %s31, 0
      %s33 = scalar_select %p32, %s31, 0
      %s34 = smul.u32 2, %s33
      %36 = vsyncadd [#allocation6], 0
      %s37 = smul.addr %s34, 8
      %s38 = scalar_lea.hbm %s1, %s37
      %s39 = sshll.u32 %s38, 4
      %s40 = int_to_ptr.hbm [resolvable:$true] %s39
      %s41 = sshll.u32 [#allocation5], 4
      %s42 = int_to_ptr.vmem [resolvable:$true] %s41
      %47 = dma.hbm_to_vmem [thread:$0]  %s40, 256, %s42, [#allocation6], 128, 128, 8
    $region9: #{tpu_custom_call.1} parent=1 // pred_fallthru
      _
    // Predicated region
    $region10: #{tpu_custom_call.1} parent=1 // pred_check
      _
    $region11: #{tpu_custom_call.1} parent=1 // pred_check_branch
      %49 = sbr.rel (0) target = $region13
    $region12: #{tpu_custom_call.1} parent=1 // pred_region
      %51 = dma.done [#allocation3], 256
    $region13: #{tpu_custom_call.1} parent=1 // pred_fallthru
      _
    // Predicated region
    $region14: #{tpu_custom_call.1} parent=1 // pred_check
      _
    $region15: #{tpu_custom_call.1} parent=1 // pred_check_branch
      %53 = sbr.rel (0) target = $region17
    $region16: #{tpu_custom_call.1} parent=1 // pred_region
      %55 = dma.done [#allocation6], 256
    $region17: #{tpu_custom_call.1} parent=1 // pred_fallthru
      _
    %s56 = sadd.s32 0, 0
    %p57 = scmp.lt.s32.totalorder %s56, 0
    %s58 = scalar_select %p57, %s56, 0
    %s59 = smul.u32 2, %s58
    %s60 = sadd.s32 0, 0
    %p61 = scmp.lt.s32.totalorder %s60, 0
    %s62 = scalar_select %p61, %s60, 0
    %s63 = smul.u32 2, %s62
    %p64 = scmp.eq.s32.totalorder 0, 0
    // Predicated region
    $region18: #{tpu_custom_call.1} parent=1 // pred_check
      %p65 = pneg %p64
    $region19: #{tpu_custom_call.1} parent=1 // pred_check_branch
      %67 = sbr.rel (%p65) target = $region21
    $region20: #{tpu_custom_call.1} parent=1 // pred_region
      %68 = vst [vmem:[#allocation7] sm:$0xff] 0.0
    $region21: #{tpu_custom_call.1} parent=1 // pred_fallthru
      _
    %v69 = vld [vmem:[#allocation7] sm:$0xff]
    %v70 = vld [vmem:[#allocation2] sm:$0xff]
    %v71 = vld [vmem:[#allocation2 + $0x8] sm:$0xff]
    %v72 = vld [vmem:[#allocation5] sm:$0xff]
    %v73 = vld [vmem:[#allocation5 + $0x8] sm:$0xff]
    %v74 = vsub.f32 %v70, %v72
    %v75 = vsub.f32 %v71, %v73
    %v76 = vmul.f32 %v74, %v74
    %v77 = vmul.f32 %v75, %v75
    %v78 = vadd.f32 %v76, %v77
    %v79 = vadd.f32 %v78, 0.0
    %v80 = vadd.f32 %v69, %v79
    %81 = vst [vmem:[#allocation7] sm:$0xff] %v80
    // Predicated region
    $region22: #{tpu_custom_call.1} parent=1 // pred_check
      _
    $region23: #{tpu_custom_call.1} parent=1 // pred_check_branch
      %83 = sbr.rel (0) target = $region25
    $region24: #{tpu_custom_call.1} parent=1 // pred_region
      %85 = vsyncadd [#allocation4], 0
      %s87 = sshll.u32 [#allocation7], 4
      %s88 = int_to_ptr.vmem [resolvable:$true] %s87
      %s89 = sshll.u32 %s2, 4
      %s90 = int_to_ptr.hbm [resolvable:$true] %s89
      %92 = dma.vmem_to_hbm [thread:$0]  %s88, 128, %s90, [#allocation4]
    $region25: #{tpu_custom_call.1} parent=1 // pred_fallthru
      _
    // Predicated region
    $region26: #{tpu_custom_call.1} parent=1 // pred_check
      _
    $region27: #{tpu_custom_call.1} parent=1 // pred_check_branch
      %94 = sbr.rel (0) target = $region29
    $region28: #{tpu_custom_call.1} parent=1 // pred_region
      %96 = dma.done [#allocation4], 128
    $region29: #{tpu_custom_call.1} parent=1 // pred_fallthru
      _
    %97 = vsyncpa [#allocation3], 1
    %98 = vsyncpa [#allocation6], 1
    %99 = vsyncpa [#allocation4], 1

</llo_original>
